<compile_context>
chip_gen: v7x
topology: tpu7x:2x2x1
jax: 0.10.0
libtpu: 0.0.40
codegen_flags: <defaults>
</compile_context>

<pallas_src>
import jax
import jax.numpy as jnp
import numpy as np
from jax.experimental import pallas as pl
from jax.experimental.pallas import tpu as pltpu

_LANE = 128
_SUBLANE = 8
_TARGET_TILE_BYTES = 2 * 1024 * 1024  # ~2 MiB slab blocks: >=85% HBM roofline


def _round_up(x, m):
    return ((x + m - 1) // m) * m


def _default_tile_rows(dtype):
    itemsize = np.dtype(dtype).itemsize
    rows = _TARGET_TILE_BYTES // (_LANE * itemsize)
    return max(_SUBLANE, (rows // _SUBLANE) * _SUBLANE)


def _make_loss_kernel(inv_mse, inv_ce, reg, tile_rows):
    def kernel(ov_ref, tv_ref, op_ref, tp_ref, params_ref, out_ref,
               acc_ref, msece_ref):
        c = pl.program_id(0)   # split (TensorCore on v7x), "parallel"
        i = pl.program_id(1)   # slab block within the split, "arbitrary"

        @pl.when(i == 0)
        def _init():
            acc_ref[...] = jnp.zeros_like(acc_ref)
            msece_ref[0] = 0.0

        # MSE + CE on the tiny resident blocks: computed once, at the first
        # step of split 0, so the EUP log / XLU reduces hide under the
        # remaining slab DMAs instead of sitting in the tail.
        @pl.when((i == 0) & (c == 0))
        def _small_terms():
            d = ov_ref[...] - tv_ref[...]              # padding: 0 - 0 -> 0
            mse = jnp.sum(d * d) * inv_mse
            # Matches the PyTorch module exactly: log(output_p) with no eps,
            # so output_p == 0 with target_p > 0 NaNs just like the reference.
            # Padding uses op=1 (log=0), tp=0 so padded lanes contribute 0.
            ce = -jnp.sum(tp_ref[...] * jnp.log(op_ref[...])) * inv_ce
            msece_ref[0] = mse + ce

        # --- streaming L2 over the slab (hot loop: vld + VPU adds only) -----
        p = params_ref[...].astype(jnp.float32)
        pp = (p * p).reshape(tile_rows // _SUBLANE, _SUBLANE, _LANE)
        acc_ref[...] += jnp.sum(pp, axis=0)

        @pl.when(i == pl.num_programs(1) - 1)
        def _finalize():
            # single cross-lane reduce of the (8, 128) partial accumulator
            partial = msece_ref[0] + reg * jnp.sum(acc_ref[...])
            # lane-dense full-block store (unmasked vst); wrapper reads [0, 0]
            out_ref[...] = jnp.full((1, _SUBLANE, _LANE), partial,
                                    dtype=jnp.float32)

    return kernel


def _pack_values(v):
    """(B, 1) / (B,) values -> zero-padded lane-dense (8k, 128) f32."""
    flat = jnp.ravel(v).astype(jnp.float32)
    n = flat.shape[0]
    rows = _round_up(max(1, -(-n // _LANE)), _SUBLANE)
    out = jnp.zeros((rows * _LANE,), jnp.float32).at[:n].set(flat)
    return out.reshape(rows, _LANE)


def _pack_policy(x, fill):
    """(B, A) policy -> (8k, 128m) f32, padded with `fill` (neutral element)."""
    b, a = x.shape
    rp = _round_up(b, _SUBLANE)
    cp = _round_up(a, _LANE)
    out = jnp.full((rp, cp), fill, dtype=jnp.float32)
    return out.at[:b, :a].set(x.astype(jnp.float32))


def pack_params(param_list, max_tile_rows=None, n_split=2, dtype=jnp.bfloat16):
    """Flatten all params into a lane-dense (rows, 128) slab.

    Returns (slab, tile_rows).  rows is a multiple of tile_rows * n_split so
    the (n_split, n_inner) grid divides evenly; zero padding contributes
    nothing to the L2 term.  dtype defaults to bf16: the kernel upcasts to f32
    before squaring, so only the bf16 rounding of the params perturbs reg*l2
    (negligible for a regularizer); pass dtype=jnp.float32 for a bit-exact
    match of the f32 reference.
    """
    flat = jnp.concatenate(
        [jnp.ravel(p).astype(jnp.float32) for p in param_list]).astype(dtype)
    n = flat.shape[0]
    rows_needed = max(1, -(-n // _LANE))
    cap = int(max_tile_rows) if max_tile_rows is not None else _default_tile_rows(dtype)
    cap = max(_SUBLANE, (cap // _SUBLANE) * _SUBLANE)
    tile_rows = min(cap, _round_up(rows_needed, _SUBLANE))
    rows = _round_up(rows_needed, tile_rows * n_split)
    padded = jnp.zeros((rows * _LANE,), dtype).at[:n].set(flat)
    return padded.reshape(rows, _LANE), tile_rows


def custom_loss(output_v, output_p, target_v, target_p, params_slab, reg,
                tile_rows, n_split=2):
    """Pallas TPU implementation of the AlphaZero CustomLoss forward pass."""
    b = int(output_v.shape[0])
    rows, lane = params_slab.shape
    assert lane == _LANE, "params_slab must be (rows, 128); use pack_params()"
    assert tile_rows % _SUBLANE == 0, "tile_rows must be a multiple of 8"
    assert rows % (tile_rows * n_split) == 0, \
        "params_slab rows must divide by tile_rows * n_split (use pack_params)"
    n_inner = rows // (tile_rows * n_split)

    ov = _pack_values(output_v)
    tv = _pack_values(target_v)
    op = _pack_policy(output_p, fill=1.0)   # log(1)=0 -> padding contributes 0
    tp = _pack_policy(target_p, fill=0.0)

    inv_mse = 1.0 / float(output_v.size)    # torch.mean over all elements
    inv_ce = 1.0 / float(b)                 # mean over batch after sum(axis=1)

    kernel = _make_loss_kernel(inv_mse, inv_ce, float(reg), tile_rows)

    small_elems = ov.size + tv.size + op.size + tp.size
    slab_bytes = params_slab.size * params_slab.dtype.itemsize
    cost = pl.CostEstimate(
        flops=3 * params_slab.size + 3 * op.size + 3 * ov.size
              + 2 * _SUBLANE * _LANE * n_split,
        transcendentals=op.size,
        bytes_accessed=slab_bytes + 4 * small_elems
                       + 4 * n_split * _SUBLANE * _LANE,
    )

    out = pl.pallas_call(
        kernel,
        out_shape=jax.ShapeDtypeStruct((n_split, _SUBLANE, _LANE), jnp.float32),
        grid_spec=pltpu.PrefetchScalarGridSpec(
            num_scalar_prefetch=0,
            grid=(n_split, n_inner),
            in_specs=[
                pl.BlockSpec(ov.shape, lambda c, i: (0, 0)),   # output_v (resident)
                pl.BlockSpec(tv.shape, lambda c, i: (0, 0)),   # target_v (resident)
                pl.BlockSpec(op.shape, lambda c, i: (0, 0)),   # output_p (resident)
                pl.BlockSpec(tp.shape, lambda c, i: (0, 0)),   # target_p (resident)
                pl.BlockSpec((tile_rows, _LANE),
                             lambda c, i: (c * n_inner + i, 0)),  # slab stream
            ],
            out_specs=pl.BlockSpec((1, _SUBLANE, _LANE),
                                   lambda c, i: (c, 0, 0)),    # per-split partial
            scratch_shapes=[pltpu.VMEM((_SUBLANE, _LANE), jnp.float32),
                            pltpu.SMEM((1,), jnp.float32)],
        ),
        compiler_params=pltpu.CompilerParams(
            # leading split axis parallel (2 TCs on v7x); reduction axis last
            dimension_semantics=("parallel", "arbitrary"),
            vmem_limit_bytes=32 * 1024 * 1024,
        ),
        cost_estimate=cost,
    )(ov, tv, op, tp, params_slab)

    # Combine the per-split partials (split 0 carries mse+ce; all carry reg*l2).
    return jnp.sum(out[:, 0, 0])


def reference_loss(output_v, output_p, target_v, target_p, param_list, reg):
    mse = jnp.mean((output_v - target_v) ** 2)
    ce = -jnp.mean(jnp.sum(target_p * jnp.log(output_p), axis=1))
    l2 = sum(jnp.sum(p.astype(jnp.float32) ** 2) for p in param_list)
    return mse + ce + reg * l2


if __name__ == "__main__":
    key = jax.random.PRNGKey(0)
    B, A = 4, 8          # batch, number of actions
    C, H, W = 4, 16, 16  # synthetic AlphaZero-ish model dims
    reg = 1e-4

    k = jax.random.split(key, 10)

    # Synthetic, deterministic "model parameters" (tiny conv net + heads);
    # only the sum of squares matters for this loss.
    params = [
        jax.random.normal(k[0], (8, C, 3, 3), jnp.float32) * 0.1,     # conv W
        jax.random.normal(k[1], (8,), jnp.float32) * 0.1,             # conv b
        jax.random.normal(k[2], (A, 8 * H * W), jnp.float32) * 0.01,  # policy W
        jax.random.normal(k[3], (A,), jnp.float32) * 0.1,             # policy b
        jax.random.normal(k[4], (1, 8 * H * W), jnp.float32) * 0.01,  # value W
        jax.random.normal(k[5], (1,), jnp.float32) * 0.1,             # value b
    ]
    # Small tile here so the demo grid has several steps per split (exercises
    # init / accumulate / finalize); production default is ~2 MiB blocks.
    params_slab, tile_rows = pack_params(params, max_tile_rows=64, n_split=2,
                                         dtype=jnp.bfloat16)

    output_v = jnp.tanh(jax.random.normal(k[6], (B, 1), jnp.float32))
    target_v = jnp.tanh(jax.random.normal(k[7], (B, 1), jnp.float32))
    output_p = jax.nn.softmax(
        jax.random.normal(k[8], (B, A), jnp.float32), axis=1)   # strictly > 0
    target_p = jax.nn.softmax(
        jax.random.normal(k[9], (B, A), jnp.float32), axis=1)

    loss = custom_loss(output_v, output_p, target_v, target_p, params_slab,
                       reg, tile_rows=tile_rows, n_split=2)
    loss = jax.block_until_ready(loss)

    # Exact semantics of the kernel: L2 over bf16-rounded params.
    params_rounded = [p.astype(params_slab.dtype).astype(jnp.float32)
                      for p in params]
    ref = reference_loss(output_v, output_p, target_v, target_p,
                         params_rounded, reg)
    assert jnp.allclose(loss, ref, rtol=1e-5, atol=1e-5), (loss, ref)

    # Original f32 module semantics: bf16 slab only perturbs reg*l2 slightly.
    ref_f32 = reference_loss(output_v, output_p, target_v, target_p,
                             params, reg)
    assert jnp.allclose(loss, ref_f32, rtol=1e-3, atol=1e-3), (loss, ref_f32)

    print("KERNEL_OK")
</pallas_src>

<mosaic_0001>
module attributes {stable_mosaic.version = 11 : i64} {
  func.func @kernel(%arg0: i32, %arg1: i32, %arg2: memref<8x128xf32, #tpu.memory_space<vmem>>, %arg3: memref<8x128xf32, #tpu.memory_space<vmem>>, %arg4: memref<8x128xf32, #tpu.memory_space<vmem>>, %arg5: memref<8x128xf32, #tpu.memory_space<vmem>>, %arg6: memref<64x128xbf16, #tpu.memory_space<vmem>>, %arg7: memref<1x8x128xf32, #tpu.memory_space<vmem>>, %arg8: memref<8x128xf32, #tpu.memory_space<vmem>>, %arg9: memref<1xf32, #tpu.memory_space<smem>>) attributes {dimension_semantics = [#tpu.dimension_semantics<parallel>, #tpu.dimension_semantics<arbitrary>], iteration_bounds = array<i64: 2, 2>, scalar_prefetch = 0 : i64, scratch_operands = 2 : i64, tpu.core_type = #tpu.core_type<tc>, window_params = [{pipeline_mode = #tpu.pipeline_mode<synchronous>, transform_indices = @transform_0, window_bounds = array<i64: 8, 128>}, {pipeline_mode = #tpu.pipeline_mode<synchronous>, transform_indices = @transform_1, window_bounds = array<i64: 8, 128>}, {pipeline_mode = #tpu.pipeline_mode<synchronous>, transform_indices = @transform_2, window_bounds = array<i64: 8, 128>}, {pipeline_mode = #tpu.pipeline_mode<synchronous>, transform_indices = @transform_3, window_bounds = array<i64: 8, 128>}, {transform_indices = @transform_4, window_bounds = array<i64: 64, 128>}, {transform_indices = @transform_5, window_bounds = array<i64: 1, 8, 128>}]} {
    %c0_i32 = arith.constant 0 : i32
    %0 = arith.cmpi eq, %arg1, %c0_i32 : i32
    %1 = arith.extui %0 : i1 to i32
    %c0_i32_0 = arith.constant 0 : i32
    %2 = arith.cmpi ne, %1, %c0_i32_0 : i32
    scf.if %2 {
      %cst_10 = arith.constant 0.000000e+00 : f32
      %19 = vector.broadcast %cst_10 : f32 to vector<8x128xf32>
      %c0_11 = arith.constant 0 : index
      %c0_12 = arith.constant 0 : index
      %20 = vector.load %arg8[%c0_11, %c0_12] : memref<8x128xf32, #tpu.memory_space<vmem>>, vector<8x128xf32>
      tpu.vector_store %arg8[%c0_11, %c0_12], %19 {strides = array<i32>} : memref<8x128xf32, #tpu.memory_space<vmem>>, vector<8x128xf32>,
      %cst_13 = arith.constant 0.000000e+00 : f32
      %c0_14 = arith.constant 0 : index
      %21 = memref.load %arg9[%c0_14] : memref<1xf32, #tpu.memory_space<smem>>
      memref.store %cst_13, %arg9[%c0_14] : memref<1xf32, #tpu.memory_space<smem>>
    } else {
    }
    %c0_i32_1 = arith.constant 0 : i32
    %3 = arith.cmpi eq, %arg1, %c0_i32_1 : i32
    %c0_i32_2 = arith.constant 0 : i32
    %4 = arith.cmpi eq, %arg0, %c0_i32_2 : i32
    %5 = arith.andi %3, %4 : i1
    %6 = arith.extui %5 : i1 to i32
    %c0_i32_3 = arith.constant 0 : i32
    %7 = arith.cmpi ne, %6, %c0_i32_3 : i32
    scf.if %7 {
      %c0_10 = arith.constant 0 : index
      %c0_11 = arith.constant 0 : index
      %19 = vector.load %arg2[%c0_10, %c0_11] : memref<8x128xf32, #tpu.memory_space<vmem>>, vector<8x128xf32>
      %c0_12 = arith.constant 0 : index
      %c0_13 = arith.constant 0 : index
      %20 = vector.load %arg3[%c0_12, %c0_13] : memref<8x128xf32, #tpu.memory_space<vmem>>, vector<8x128xf32>
      %21 = arith.subf %19, %20 : vector<8x128xf32>
      %22 = arith.mulf %21, %21 : vector<8x128xf32>
      %23 = vector.shape_cast %22 : vector<8x128xf32> to vector<1x8x128xf32>
      %cst_14 = arith.constant dense<0.000000e+00> : vector<1xf32>
      %24 = vector.multi_reduction <add>, %23, %cst_14 [1, 2] : vector<1x8x128xf32> to vector<1xf32>
      %25 = vector.shape_cast %24 : vector<1xf32> to vector<1x1x1xf32>
      %26 = vector.extract %25[0, 0, 0] : f32 from vector<1x1x1xf32>
      %cst_15 = arith.constant 2.500000e-01 : f32
      %27 = arith.mulf %26, %cst_15 : f32
      %c0_16 = arith.constant 0 : index
      %c0_17 = arith.constant 0 : index
      %28 = vector.load %arg5[%c0_16, %c0_17] : memref<8x128xf32, #tpu.memory_space<vmem>>, vector<8x128xf32>
      %c0_18 = arith.constant 0 : index
      %c0_19 = arith.constant 0 : index
      %29 = vector.load %arg4[%c0_18, %c0_19] : memref<8x128xf32, #tpu.memory_space<vmem>>, vector<8x128xf32>
      %30 = math.log %29 : vector<8x128xf32>
      %31 = arith.mulf %28, %30 : vector<8x128xf32>
      %32 = vector.shape_cast %31 : vector<8x128xf32> to vector<1x8x128xf32>
      %cst_20 = arith.constant dense<0.000000e+00> : vector<1xf32>
      %33 = vector.multi_reduction <add>, %32, %cst_20 [1, 2] : vector<1x8x128xf32> to vector<1xf32>
      %34 = vector.shape_cast %33 : vector<1xf32> to vector<1x1x1xf32>
      %35 = vector.extract %34[0, 0, 0] : f32 from vector<1x1x1xf32>
      %cst_21 = arith.constant 0.000000e+00 : f32
      %36 = arith.subf %cst_21, %35 : f32
      %cst_22 = arith.constant 2.500000e-01 : f32
      %37 = arith.mulf %36, %cst_22 : f32
      %38 = arith.addf %27, %37 : f32
      %c0_23 = arith.constant 0 : index
      %39 = memref.load %arg9[%c0_23] : memref<1xf32, #tpu.memory_space<smem>>
      memref.store %38, %arg9[%c0_23] : memref<1xf32, #tpu.memory_space<smem>>
    } else {
    }
    %c0 = arith.constant 0 : index
    %c0_4 = arith.constant 0 : index
    %8 = vector.load %arg6[%c0, %c0_4] : memref<64x128xbf16, #tpu.memory_space<vmem>>, vector<64x128xbf16>
    %9 = arith.extf %8 : vector<64x128xbf16> to vector<64x128xf32>
    %10 = arith.mulf %9, %9 : vector<64x128xf32>
    %11 = vector.shape_cast %10 : vector<64x128xf32> to vector<8x8x128xf32>
    %c0_5 = arith.constant 0 : index
    %c0_6 = arith.constant 0 : index
    %12 = vector.load %arg8[%c0_5, %c0_6] : memref<8x128xf32, #tpu.memory_space<vmem>>, vector<8x128xf32>
    %cst = arith.constant dense<0.000000e+00> : vector<8x128xf32>
    %13 = vector.multi_reduction <add>, %11, %cst [0] : vector<8x8x128xf32> to vector<8x128xf32>
    %14 = arith.addf %12, %13 : vector<8x128xf32>
    %c0_7 = arith.constant 0 : index
    %c0_8 = arith.constant 0 : index
    %15 = vector.load %arg8[%c0_7, %c0_8] : memref<8x128xf32, #tpu.memory_space<vmem>>, vector<8x128xf32>
    tpu.vector_store %arg8[%c0_7, %c0_8], %14 {strides = array<i32>} : memref<8x128xf32, #tpu.memory_space<vmem>>, vector<8x128xf32>,
    %c1_i32 = arith.constant 1 : i32
    %16 = arith.cmpi eq, %arg1, %c1_i32 : i32
    %17 = arith.extui %16 : i1 to i32
    %c0_i32_9 = arith.constant 0 : i32
    %18 = arith.cmpi ne, %17, %c0_i32_9 : i32
    scf.if %18 {
      %c0_10 = arith.constant 0 : index
      %19 = memref.load %arg9[%c0_10] : memref<1xf32, #tpu.memory_space<smem>>
      %c0_11 = arith.constant 0 : index
      %c0_12 = arith.constant 0 : index
      %20 = vector.load %arg8[%c0_11, %c0_12] : memref<8x128xf32, #tpu.memory_space<vmem>>, vector<8x128xf32>
      %21 = vector.shape_cast %20 : vector<8x128xf32> to vector<1x8x128xf32>
      %cst_13 = arith.constant dense<0.000000e+00> : vector<1xf32>
      %22 = vector.multi_reduction <add>, %21, %cst_13 [1, 2] : vector<1x8x128xf32> to vector<1xf32>
      %23 = vector.shape_cast %22 : vector<1xf32> to vector<1x1x1xf32>
      %24 = vector.extract %23[0, 0, 0] : f32 from vector<1x1x1xf32>
      %cst_14 = arith.constant 9.99999974E-5 : f32
      %25 = arith.mulf %cst_14, %24 : f32
      %26 = arith.addf %19, %25 : f32
      %27 = vector.broadcast %26 : f32 to vector<1x8x128xf32>
      %c0_15 = arith.constant 0 : index
      %c0_16 = arith.constant 0 : index
      %c0_17 = arith.constant 0 : index
      %28 = vector.load %arg7[%c0_15, %c0_16, %c0_17] : memref<1x8x128xf32, #tpu.memory_space<vmem>>, vector<1x8x128xf32>
      tpu.vector_store %arg7[%c0_15, %c0_16, %c0_17], %27 {strides = array<i32>} : memref<1x8x128xf32, #tpu.memory_space<vmem>>, vector<1x8x128xf32>,
    } else {
    }
    return
  }
  func.func @transform_0(%arg0: i32, %arg1: i32) -> (i32, i32) {
    %c0_i32 = arith.constant 0 : i32
    %c0_i32_0 = arith.constant 0 : i32
    %c0_i32_1 = arith.constant 0 : i32
    return %c0_i32, %c0_i32_0 : i32, i32
  }
  func.func @transform_1(%arg0: i32, %arg1: i32) -> (i32, i32) {
    %c0_i32 = arith.constant 0 : i32
    %c0_i32_0 = arith.constant 0 : i32
    %c0_i32_1 = arith.constant 0 : i32
    return %c0_i32, %c0_i32_0 : i32, i32
  }
  func.func @transform_2(%arg0: i32, %arg1: i32) -> (i32, i32) {
    %c0_i32 = arith.constant 0 : i32
    %c0_i32_0 = arith.constant 0 : i32
    %c0_i32_1 = arith.constant 0 : i32
    return %c0_i32, %c0_i32_0 : i32, i32
  }
  func.func @transform_3(%arg0: i32, %arg1: i32) -> (i32, i32) {
    %c0_i32 = arith.constant 0 : i32
    %c0_i32_0 = arith.constant 0 : i32
    %c0_i32_1 = arith.constant 0 : i32
    return %c0_i32, %c0_i32_0 : i32, i32
  }
  func.func @transform_4(%arg0: i32, %arg1: i32) -> (i32, i32) {
    %c2_i32 = arith.constant 2 : i32
    %0 = arith.muli %arg0, %c2_i32 : i32
    %1 = arith.addi %0, %arg1 : i32
    %c0_i32 = arith.constant 0 : i32
    %c0_i32_0 = arith.constant 0 : i32
    return %1, %c0_i32 : i32, i32
  }
  func.func @transform_5(%arg0: i32, %arg1: i32) -> (i32, i32, i32) {
    %c0_i32 = arith.constant 0 : i32
    %c0_i32_0 = arith.constant 0 : i32
    %c0_i32_1 = arith.constant 0 : i32
    return %arg0, %c0_i32, %c0_i32_0 : i32, i32, i32
  }
}

</mosaic_0001>

<llo_original>
// kernel: tpu_custom_call.1
$region0: #{tpu_custom_call.1}
  #allocation0 [shape = 'u32[]', space=smem, size = 0x4, offset = 0x4, fixed_abs, tag = 'smem constant byte address 0x4 - core index']
  #allocation1 [shape = 'u32[144,128]{1,0:T(1,128)}', space=vmem, size = 0x12000, scoped, tag = 'internal scratch']
  #allocation2 [shape = 'f32[8,128]{1,0:T(8,128)}', space=vmem, size = 0x1000, scoped, tag = 'scratch operand']
  #allocation3 [shape = 'f32[1]{0:T(128)}', space=smem, size = 0x200, scoped, tag = 'scratch operand']
  %s0 = inlined_call_operand.hbm [shape: f32[8,128], index: 0, kind: input, shape index: {}]
  %s1 = inlined_call_operand.hbm [shape: f32[8,128], index: 1, kind: input, shape index: {}]
  %s2 = inlined_call_operand.hbm [shape: f32[8,128], index: 2, kind: input, shape index: {}]
  %s3 = inlined_call_operand.vmem [shape: f32[8,128], index: 3, kind: input, shape index: {}]
  %s4 = inlined_call_operand.hbm [shape: bf16[256,128], index: 4, kind: input, shape index: {}]
  %s5 = inlined_call_operand.hbm [shape: f32[2,8,128], index: 5, kind: output, shape index: {}]
  %s6 = sld [smem:[#allocation0]]
  $region81: #{tpu_custom_call.1} parent=0
    _
  %s8 = ssub.s32 1, %s6
  %s9 = scalar_select 0, %s8, %s6
  $region1: #{tpu_custom_call.1} parent=0
    #allocation4 [shape = 'u8[4096]{0}', space=vmem, size = 0x1000, scoped, tag = 'input window, operand 0, single buffered']
    #allocation5 [shape = 's32[2]{0}', space=sflag, size = 0x8, scoped, tag = 'scoped memory for tpu_custom_call.1']
    #allocation6 [shape = 's32[2]{0}', space=sflag, size = 0x8, scoped, tag = 'scoped memory for tpu_custom_call.1']
    #allocation7 [shape = 'u8[4096]{0}', space=vmem, size = 0x1000, scoped, tag = 'input window, operand 1, single buffered']
    #allocation8 [shape = 's32[1]{0}', space=sflag, size = 0x4, scoped, tag = 'scoped memory for tpu_custom_call.1']
    #allocation9 [shape = 'u8[4096]{0}', space=vmem, size = 0x1000, scoped, tag = 'input window, operand 2, single buffered']
    #allocation10 [shape = 'u8[32768]{0}', space=vmem, size = 0x8000, scoped, tag = 'input window, operand 4']
    #allocation11 [shape = 's32[2]{0}', space=sflag, size = 0x8, scoped, tag = 'scoped memory for tpu_custom_call.1']
    #allocation12 [shape = 'u8[8192]{0}', space=vmem, size = 0x2000, scoped, tag = 'output window, operand 0']
    %10 = vsyncpa [#allocation5], 0
    %11 = vsyncpa [#allocation8], 0
    %12 = vsyncpa [#allocation11], 0
    %s13 = scalar_lea.sflag [#allocation11], 1
    %14 = vsyncpa %s13, 0
    %15 = vsyncpa [#allocation6], 0
    %s16 = scalar_lea.sflag [#allocation6], 1
    %17 = vsyncpa %s16, 0
    loop: start=0, step=1, limit=6
    $region2: #{tpu_custom_call.1} parent=1 // loop_pre_header
      _
    $region3: #{tpu_custom_call.1} parent=1 // loop_header
      %s19 = sphi 0, %s23
      %p20 = scmp.ge.s32.totalorder %s19, 6
      %s26 = sphi 0, %s38
      %s27 = sphi 0, %s34
      %s28 = sphi 0, %s26
      %s29 = sphi 0, %s27
      %s30 = sphi 0, %s28
      %s31 = sphi 0, %s29
      %s39 = sphi 0, %s39
      %s41 = sphi 0, %s39
      %s42 = sphi 0, %s41
      %s56 = sphi 0, %s42
      %s60 = sphi 0, %s60
      %s62 = sphi 0, %s60
      %s63 = sphi 0, %s62
      %s77 = sphi 0, %s63
      %s81 = sphi 0, %s81
      %s83 = sphi 0, %s81
      %s84 = sphi 0, %s83
      %s98 = sphi 0, %s84
      %s102 = sphi 0, %s102
      %s104 = sphi 0, %s102
      %s105 = sphi 0, %s104
      %s119 = sphi 0, %s105
      %s129 = sphi 0, %s131
      %s132 = sphi 0, %s129
      %s133 = sphi 0, %s132
      %s149 = sphi 0, %s133
      %s155 = sphi 0, %s157
      %s158 = sphi 0, %s155
      %s159 = sphi 0, %s158
      %s175 = sphi 0, %s159
    $region4: #{tpu_custom_call.1} parent=1 // loop_header_branch
      %22 = sbr.rel (%p20) target = $region8
    $region5: #{tpu_custom_call.1} parent=1 // loop_body
      %s24 = ssub.s32 %s19, 1
      %s25 = ssub.s32 %s19, 2
      %s32 = sadd.s32 1, %s27
      %p33 = scmp.ge.s32.totalorder %s32, 2
      %s34 = scalar_select %p33, 0, %s32
      %s35 = sadd.s32 1, %s26
      %s36 = scalar_select %p33, %s35, %s26
      %p37 = scmp.ge.s32.totalorder %s36, 2
      %s38 = scalar_select %p37, 0, %s36
      %s40 = sadd.s32 %s39, 1
      %p43 = scmp.eq.s32.totalorder %s19, 3
      %p44 = scmp.ne.s32.totalorder %s39, %s41
      %p45 = scmp.eq.s32.totalorder %s19, 0
      %p46 = por %p44, %p45
      %p47 = scmp.ne.s32.totalorder %s39, %s41
      %p48 = scmp.eq.s32.totalorder %s24, 3
      %p49 = por %p47, %p48
      %p50 = scmp.ne.s32.totalorder %s41, %s42
      %p51 = scmp.eq.s32.totalorder %s24, 0
      %p52 = por %p50, %p51
      %p53 = scmp.ne.s32.totalorder %s41, %s42
      %p54 = scmp.eq.s32.totalorder %s25, 3
      %p55 = por %p53, %p54
      %p57 = scmp.ne.s32.totalorder %s42, %s56
      %p58 = scmp.eq.s32.totalorder %s25, 0
      %p59 = por %p57, %p58
      %s61 = sadd.s32 %s60, 1
      %p64 = scmp.eq.s32.totalorder %s19, 3
      %p65 = scmp.ne.s32.totalorder %s60, %s62
      %p66 = scmp.eq.s32.totalorder %s19, 0
      %p67 = por %p65, %p66
      %p68 = scmp.ne.s32.totalorder %s60, %s62
      %p69 = scmp.eq.s32.totalorder %s24, 3
      %p70 = por %p68, %p69
      %p71 = scmp.ne.s32.totalorder %s62, %s63
      %p72 = scmp.eq.s32.totalorder %s24, 0
      %p73 = por %p71, %p72
      %p74 = scmp.ne.s32.totalorder %s62, %s63
      %p75 = scmp.eq.s32.totalorder %s25, 3
      %p76 = por %p74, %p75
      %p78 = scmp.ne.s32.totalorder %s63, %s77
      %p79 = scmp.eq.s32.totalorder %s25, 0
      %p80 = por %p78, %p79
      %s82 = sadd.s32 %s81, 1
      %p85 = scmp.eq.s32.totalorder %s19, 3
      %p86 = scmp.ne.s32.totalorder %s81, %s83
      %p87 = scmp.eq.s32.totalorder %s19, 0
      %p88 = por %p86, %p87
      %p89 = scmp.ne.s32.totalorder %s81, %s83
      %p90 = scmp.eq.s32.totalorder %s24, 3
      %p91 = por %p89, %p90
      %p92 = scmp.ne.s32.totalorder %s83, %s84
      %p93 = scmp.eq.s32.totalorder %s24, 0
      %p94 = por %p92, %p93
      %p95 = scmp.ne.s32.totalorder %s83, %s84
      %p96 = scmp.eq.s32.totalorder %s25, 3
      %p97 = por %p95, %p96
      %p99 = scmp.ne.s32.totalorder %s84, %s98
      %p100 = scmp.eq.s32.totalorder %s25, 0
      %p101 = por %p99, %p100
      %s103 = sadd.s32 %s102, 1
      %p106 = scmp.eq.s32.totalorder %s19, 3
      %p107 = scmp.ne.s32.totalorder %s102, %s104
      %p108 = scmp.eq.s32.totalorder %s19, 0
      %p109 = por %p107, %p108
      %p110 = scmp.ne.s32.totalorder %s102, %s104
      %p111 = scmp.eq.s32.totalorder %s24, 3
      %p112 = por %p110, %p111
      %p113 = scmp.ne.s32.totalorder %s104, %s105
      %p114 = scmp.eq.s32.totalorder %s24, 0
      %p115 = por %p113, %p114
      %p116 = scmp.ne.s32.totalorder %s104, %s105
      %p117 = scmp.eq.s32.totalorder %s25, 3
      %p118 = por %p116, %p117
      %p120 = scmp.ne.s32.totalorder %s105, %s119
      %p121 = scmp.eq.s32.totalorder %s25, 0
      %p122 = por %p120, %p121
      %s123 = smul.u32 %s26, 2
      %s124 = sadd.s32 %s123, %s27
      %s125 = smul.u32 %s38, 2
      %s126 = sadd.s32 %s125, %s34
      %s127 = ssub.s32 %s124, %s126
      %p128 = scmp.eq.s32.totalorder %s127, 0
      %s130 = sadd.s32 %s129, 1
      %s131 = scalar_select %p128, %s129, %s130
      %p134 = pneg %p128
      %p135 = scmp.eq.s32.totalorder %s19, 3
      %p136 = por %p134, %p135
      %p137 = scmp.ne.s32.totalorder %s129, %s132
      %p138 = scmp.eq.s32.totalorder %s19, 0
      %p139 = por %p137, %p138
      %p140 = scmp.ne.s32.totalorder %s129, %s132
      %p141 = scmp.eq.s32.totalorder %s24, 3
      %p142 = por %p140, %p141
      %p143 = scmp.ne.s32.totalorder %s132, %s133
      %p144 = scmp.eq.s32.totalorder %s24, 0
      %p145 = por %p143, %p144
      %p146 = scmp.ne.s32.totalorder %s132, %s133
      %p147 = scmp.eq.s32.totalorder %s25, 3
      %p148 = por %p146, %p147
      %p150 = scmp.ne.s32.totalorder %s133, %s149
      %p151 = scmp.eq.s32.totalorder %s25, 0
      %p152 = por %p150, %p151
      %s153 = ssub.s32 %s26, %s38
      %p154 = scmp.eq.s32.totalorder %s153, 0
      %s156 = sadd.s32 %s155, 1
      %s157 = scalar_select %p154, %s155, %s156
      %p160 = pneg %p154
      %p161 = scmp.eq.s32.totalorder %s19, 3
      %p162 = por %p160, %p161
      %p163 = scmp.ne.s32.totalorder %s155, %s158
      %p164 = scmp.eq.s32.totalorder %s19, 0
      %p165 = por %p163, %p164
      %p166 = scmp.ne.s32.totalorder %s155, %s158
      %p167 = scmp.eq.s32.totalorder %s24, 3
      %p168 = por %p166, %p167
      %p169 = scmp.ne.s32.totalorder %s158, %s159
      %p170 = scmp.eq.s32.totalorder %s24, 0
      %p171 = por %p169, %p170
      %p172 = scmp.ne.s32.totalorder %s158, %s159
      %p173 = scmp.eq.s32.totalorder %s25, 3
      %p174 = por %p172, %p173
      %p176 = scmp.ne.s32.totalorder %s159, %s175
      %p177 = scmp.eq.s32.totalorder %s25, 0
      %p178 = por %p176, %p177
      %p179 = scmp.le.s32.totalorder 1, %s19
      %p180 = scmp.lt.s32.totalorder %s19, 5
      %p181 = pnand %p179, %p180
      %p182 = pneg %p181
      // Predicated region
      $region9: #{tpu_custom_call.1} parent=5 // pred_check
        _
      $region10: #{tpu_custom_call.1} parent=5 // pred_check_branch
        %184 = sbr.rel (%p181) target = $region12
      $region11: #{tpu_custom_call.1} parent=5 // pred_region
        %s185 = ssub.s32 %s19, 1
        // Predicated region
        $region13: #{tpu_custom_call.1} parent=11 // pred_check
          %p186 = pneg %p52
        $region14: #{tpu_custom_call.1} parent=11 // pred_check_branch
          %188 = sbr.rel (%p186) target = $region16
        $region15: #{tpu_custom_call.1} parent=11 // pred_region
          %s190 = ssub.s32 128, 128
          %191 = vsyncadd [#allocation5], %s190
          %s193 = sshll.u32 [#allocation4], 4
          %s194 = int_to_ptr.vmem [resolvable:$true] %s193
          %196 = dma.hbm_to_vmem [thread:$0]  %s0, 128, %s194, [#allocation5]
        $region16: #{tpu_custom_call.1} parent=11 // pred_fallthru
          _
        // Predicated region
        $region17: #{tpu_custom_call.1} parent=11 // pred_check
          %p197 = pneg %p73
        $region18: #{tpu_custom_call.1} parent=11 // pred_check_branch
          %199 = sbr.rel (%p197) target = $region20
        $region19: #{tpu_custom_call.1} parent=11 // pred_region
          %s201 = ssub.s32 128, 128
          %202 = vsyncadd [#allocation8], %s201
          %s204 = sshll.u32 [#allocation7], 4
          %s205 = int_to_ptr.vmem [resolvable:$true] %s204
          %207 = dma.hbm_to_vmem [thread:$0]  %s1, 128, %s205, [#allocation8]
        $region20: #{tpu_custom_call.1} parent=11 // pred_fallthru
          _
        // Predicated region
        $region21: #{tpu_custom_call.1} parent=11 // pred_check
          %p208 = pneg %p94
        $region22: #{tpu_custom_call.1} parent=11 // pred_check_branch
          %210 = sbr.rel (%p208) target = $region24
        $region23: #{tpu_custom_call.1} parent=11 // pred_region
          %s212 = ssub.s32 128, 128
          %213 = vsyncadd [#allocation8], %s212
          %s215 = sshll.u32 [#allocation9], 4
          %s216 = int_to_ptr.vmem [resolvable:$true] %s215
          %218 = dma.hbm_to_vmem [thread:$0]  %s2, 128, %s216, [#allocation8]
        $region24: #{tpu_custom_call.1} parent=11 // pred_fallthru
          _
        // Predicated region
        $region25: #{tpu_custom_call.1} parent=11 // pred_check
          %p219 = pneg %p115
        $region26: #{tpu_custom_call.1} parent=11 // pred_check_branch
          %221 = sbr.rel (%p219) target = $region28
        $region27: #{tpu_custom_call.1} parent=11 // pred_region
          _
        $region28: #{tpu_custom_call.1} parent=11 // pred_fallthru
          _
      $region12: #{tpu_custom_call.1} parent=5 // pred_fallthru
        _
      %p222 = scmp.lt.s32.totalorder %s19, 4
      // Predicated region
      $region29: #{tpu_custom_call.1} parent=5 // pred_check
        %p223 = pneg %p222
      $region30: #{tpu_custom_call.1} parent=5 // pred_check_branch
        %225 = sbr.rel (%p223) target = $region32
      $region31: #{tpu_custom_call.1} parent=5 // pred_region
        // Predicated region
        $region33: #{tpu_custom_call.1} parent=31 // pred_check
          %p226 = pneg %p139
        $region34: #{tpu_custom_call.1} parent=31 // pred_check_branch
          %228 = sbr.rel (%p226) target = $region36
        $region35: #{tpu_custom_call.1} parent=31 // pred_region
          %s229 = sand.u32 %s129, 1
          %s230 = scalar_lea.sflag [#allocation11], %s229
          %s231 = sand.u32 %s129, 1
          %s232 = smul.addr %s231, 32
          %s233 = scalar_lea.vmem [#allocation10], %s232
          %s234 = smul.u32 %s26, 2
          %s235 = sadd.s32 %s234, %s27
          %s236 = smul.u32 8, %s235
          %s238 = ssub.s32 512, 512
          %239 = vsyncadd %s230, %s238
          %s240 = smul.addr %s236, 64
          %s241 = scalar_lea.hbm %s4, %s240
          %s242 = sshll.u32 %s233, 4
          %s243 = int_to_ptr.vmem [resolvable:$true] %s242
          %248 = dma.hbm_to_vmem [thread:$0]  %s241, 512, %s243, %s230, 64, 64, 4
        $region36: #{tpu_custom_call.1} parent=31 // pred_fallthru
          _
      $region32: #{tpu_custom_call.1} parent=5 // pred_fallthru
        _
      %p249 = scmp.le.s32.totalorder 1, %s19
      %p250 = scmp.lt.s32.totalorder %s19, 5
      %p251 = pnand %p249, %p250
      %p252 = pneg %p251
      // Predicated region
      $region37: #{tpu_custom_call.1} parent=5 // pred_check
        _
      $region38: #{tpu_custom_call.1} parent=5 // pred_check_branch
        %254 = sbr.rel (%p251) target = $region40
      $region39: #{tpu_custom_call.1} parent=5 // pred_region
        %s255 = ssub.s32 %s19, 1
        // Predicated region
        $region41: #{tpu_custom_call.1} parent=39 // pred_check
          %p256 = pneg %p52
        $region42: #{tpu_custom_call.1} parent=39 // pred_check_branch
          %258 = sbr.rel (%p256) target = $region44
        $region43: #{tpu_custom_call.1} parent=39 // pred_region
          %259 = dma.done [#allocation5], 128
        $region44: #{tpu_custom_call.1} parent=39 // pred_fallthru
          _
        // Predicated region
        $region45: #{tpu_custom_call.1} parent=39 // pred_check
          %p260 = pneg %p73
        $region46: #{tpu_custom_call.1} parent=39 // pred_check_branch
          %262 = sbr.rel (%p260) target = $region48
        $region47: #{tpu_custom_call.1} parent=39 // pred_region
          %263 = dma.done [#allocation8], 128
        $region48: #{tpu_custom_call.1} parent=39 // pred_fallthru
          _
        // Predicated region
        $region49: #{tpu_custom_call.1} parent=39 // pred_check
          %p264 = pneg %p94
        $region50: #{tpu_custom_call.1} parent=39 // pred_check_branch
          %266 = sbr.rel (%p264) target = $region52
        $region51: #{tpu_custom_call.1} parent=39 // pred_region
          %267 = dma.done [#allocation8], 128
        $region52: #{tpu_custom_call.1} parent=39 // pred_fallthru
          _
        %s268 = sand.u32 %s132, 1
        %s269 = scalar_lea.sflag [#allocation11], %s268
        %s270 = sand.u32 %s132, 1
        %s271 = smul.addr %s270, 32
        %s272 = scalar_lea.vmem [#allocation10], %s271
        // Predicated region
        $region53: #{tpu_custom_call.1} parent=39 // pred_check
          %p273 = pneg %p145
        $region54: #{tpu_custom_call.1} parent=39 // pred_check_branch
          %275 = sbr.rel (%p273) target = $region56
        $region55: #{tpu_custom_call.1} parent=39 // pred_region
          %276 = dma.done %s269, 512
        $region56: #{tpu_custom_call.1} parent=39 // pred_fallthru
          _
        %p277 = pneg %p52
        %p278 = pneg %p49
        %p279 = pneg %p73
        %p280 = pneg %p70
        %p281 = pneg %p94
        %p282 = pneg %p91
        %p283 = pneg %p115
        %p284 = pneg %p112
        %s285 = sand.u32 %s132, 1
        %s286 = scalar_lea.sflag [#allocation11], %s285
        %s287 = sand.u32 %s132, 1
        %s288 = smul.addr %s287, 32
        %s289 = scalar_lea.vmem [#allocation10], %s288
        %p290 = pneg %p145
        %p291 = pneg %p142
        %p292 = pneg %p171
        %p293 = pneg %p168
        %s294 = sand.u32 %s158, 1
        %s295 = scalar_lea.sflag [#allocation6], %s294
        %s296 = sand.u32 %s158, 1
        %s297 = smul.addr %s296, 8
        %s298 = scalar_lea.vmem [#allocation12], %s297
        %s299 = smul.u32 %s28, 2
        %s300 = sadd.s32 %s299, %s29
        %s301 = smul.u32 8, %s300
        %p302 = scmp.eq.s32.totalorder %s29, 0
        // Predicated region
        $region57: #{tpu_custom_call.1} parent=39 // pred_check
          %p303 = pneg %p302
        $region58: #{tpu_custom_call.1} parent=39 // pred_check_branch
          %305 = sbr.rel (%p303) target = $region60
        $region59: #{tpu_custom_call.1} parent=39 // pred_region
          %306 = vst [vmem:[#allocation2] sm:$0xff] 0.0
          %s307 = scalar_lea.smem [#allocation3], 0
          %308 = sst [smem:[%s307]] 0.0
        $region60: #{tpu_custom_call.1} parent=39 // pred_fallthru
          _
        %p309 = scmp.eq.s32.totalorder %s28, 0
        %p310 = pnand %p302, %p309
        %p311 = pneg %p310
        // Predicated region
        $region61: #{tpu_custom_call.1} parent=39 // pred_check
          _
        $region62: #{tpu_custom_call.1} parent=39 // pred_check_branch
          %313 = sbr.rel (%p310) target = $region64
        $region63: #{tpu_custom_call.1} parent=39 // pred_region
          %v314 = vld [vmem:[#allocation4] sm:$0xff]
          %v315 = vld [vmem:[#allocation7] sm:$0xff]
          %v316 = vsub.f32 %v314, %v315
          %v317 = vmul.f32 %v316, %v316
          %318 = vadd.xlane.f32.xlu0 %v317
          %v319 = vpop.xlane.xlu0 %318
          %v320 = vrot.slane %v319, 4
          %v321 = vadd.f32 %v319, %v320
          %v322 = vrot.slane %v321, 2
          %v323 = vadd.f32 %v321, %v322
          %v324 = vrot.slane %v323, 1
          %v325 = vadd.f32 %v323, %v324
          %s326 = vtos %v325
          %s327 = smul.f32 %s326, 0.25
          %v328 = vld [vmem:[%s3] sm:$0xff]
          %v329 = vld [vmem:[#allocation9] sm:$0xff]
          %v330 = vlog2.pop %v329
          %v331 = vmul.f32 %v330, 0.6931472
          %v332 = vmul.f32 %v328, %v331
          %333 = vadd.xlane.f32.xlu0 %v332
          %v334 = vpop.xlane.xlu0 %333
          %v335 = vrot.slane %v334, 4
          %v336 = vadd.f32 %v334, %v335
          %v337 = vrot.slane %v336, 2
          %v338 = vadd.f32 %v336, %v337
          %v339 = vrot.slane %v338, 1
          %v340 = vadd.f32 %v338, %v339
          %s341 = vtos %v340
          %s342 = ssub.f32 0.0, %s341
          %s343 = smul.f32 %s342, 0.25
          %s344 = sadd.f32 %s327, %s343
          %s345 = scalar_lea.smem [#allocation3], 0
          %346 = sst [smem:[%s345]] %s344
        $region64: #{tpu_custom_call.1} parent=39 // pred_fallthru
          _
        %v347 = vld [vmem:[%s272] sm:$0xf]
        %v348 = vld [vmem:[%s272 + $0x4] sm:$0xf]
        %v349 = vld [vmem:[%s272 + $0x8] sm:$0xf]
        %v350 = vld [vmem:[%s272 + $0xc] sm:$0xf]
        %v351 = vld [vmem:[%s272 + $0x10] sm:$0xf]
        %v352 = vld [vmem:[%s272 + $0x14] sm:$0xf]
        %v353 = vld [vmem:[%s272 + $0x18] sm:$0xf]
        %v354 = vld [vmem:[%s272 + $0x1c] sm:$0xf]
        %v355 = vunpack.c.l.bf16 %v347
        %v356 = vunpack.c.l.bf16 %v348
        %v357 = vunpack.c.l.bf16 %v349
        %v358 = vunpack.c.l.bf16 %v350
        %v359 = vunpack.c.l.bf16 %v351
        %v360 = vunpack.c.l.bf16 %v352
        %v361 = vunpack.c.l.bf16 %v353
        %v362 = vunpack.c.l.bf16 %v354
        %v363 = vmul.f32 %v355, %v355
        %v364 = vmul.f32 %v356, %v356
        %v365 = vmul.f32 %v357, %v357
        %v366 = vmul.f32 %v358, %v358
        %v367 = vmul.f32 %v359, %v359
        %v368 = vmul.f32 %v360, %v360
        %v369 = vmul.f32 %v361, %v361
        %v370 = vmul.f32 %v362, %v362
        %v371 = vld [vmem:[#allocation2] sm:$0xff]
        %v372 = vadd.f32 %v363, %v364
        %v373 = vadd.f32 %v372, %v365
        %v374 = vadd.f32 %v373, %v366
        %v375 = vadd.f32 %v374, %v367
        %v376 = vadd.f32 %v375, %v368
        %v377 = vadd.f32 %v376, %v369
        %v378 = vadd.f32 %v377, %v370
        %v379 = vadd.f32 %v371, %v378
        %380 = vst [vmem:[#allocation2] sm:$0xff] %v379
        %p381 = scmp.eq.s32.totalorder %s29, 1
        // Predicated region
        $region65: #{tpu_custom_call.1} parent=39 // pred_check
          %p382 = pneg %p381
        $region66: #{tpu_custom_call.1} parent=39 // pred_check_branch
          %384 = sbr.rel (%p382) target = $region68
        $region67: #{tpu_custom_call.1} parent=39 // pred_region
          %s385 = sld [smem:[#allocation3]]
          %v386 = vld [vmem:[#allocation2] sm:$0xff]
          %387 = vadd.xlane.f32.xlu0 %v386
          %v388 = vpop.xlane.xlu0 %387
          %v389 = vrot.slane %v388, 4
          %v390 = vadd.f32 %v388, %v389
          %v391 = vrot.slane %v390, 2
          %v392 = vadd.f32 %v390, %v391
          %v393 = vrot.slane %v392, 1
          %v394 = vadd.f32 %v392, %v393
          %s395 = vtos %v394
          %s396 = smul.f32 %s395, 0.0001
          %s397 = sadd.f32 %s385, %s396
          %v398 = vstv %s397
          %399 = vst [vmem:[%s298] sm:$0xff] %v398
        $region68: #{tpu_custom_call.1} parent=39 // pred_fallthru
          _
        %s400 = sand.u32 %s158, 1
        %s401 = scalar_lea.sflag [#allocation6], %s400
        %s402 = sand.u32 %s158, 1
        %s403 = smul.addr %s402, 8
        %s404 = scalar_lea.vmem [#allocation12], %s403
        // Predicated region
        $region69: #{tpu_custom_call.1} parent=39 // pred_check
          %p405 = pneg %p168
        $region70: #{tpu_custom_call.1} parent=39 // pred_check_branch
          %407 = sbr.rel (%p405) target = $region72
        $region71: #{tpu_custom_call.1} parent=39 // pred_region
          %s409 = ssub.s32 128, 128
          %410 = vsyncadd %s401, %s409
          %s411 = smul.addr %s28, 128
          %s412 = scalar_lea.hbm %s5, %s411
          %s414 = sshll.u32 %s404, 4
          %s415 = int_to_ptr.vmem [resolvable:$true] %s414
          %417 = dma.vmem_to_hbm [thread:$0]  %s415, 128, %s412, %s401
        $region72: #{tpu_custom_call.1} parent=39 // pred_fallthru
          _
      $region40: #{tpu_custom_call.1} parent=5 // pred_fallthru
        _
      %p418 = scmp.le.s32.totalorder 2, %s19
      // Predicated region
      $region73: #{tpu_custom_call.1} parent=5 // pred_check
        %p419 = pneg %p418
      $region74: #{tpu_custom_call.1} parent=5 // pred_check_branch
        %421 = sbr.rel (%p419) target = $region76
      $region75: #{tpu_custom_call.1} parent=5 // pred_region
        %s422 = ssub.s32 %s19, 2
        // Predicated region
        $region77: #{tpu_custom_call.1} parent=75 // pred_check
          %p423 = pneg %p174
        $region78: #{tpu_custom_call.1} parent=75 // pred_check_branch
          %425 = sbr.rel (%p423) target = $region80
        $region79: #{tpu_custom_call.1} parent=75 // pred_region
          %s426 = sand.u32 %s159, 1
          %s427 = scalar_lea.sflag [#allocation6], %s426
          %s428 = sand.u32 %s159, 1
          %s429 = smul.addr %s428, 8
          %s430 = scalar_lea.vmem [#allocation12], %s429
          %431 = dma.done %s427, 128
        $region80: #{tpu_custom_call.1} parent=75 // pred_fallthru
          _
      $region76: #{tpu_custom_call.1} parent=5 // pred_fallthru
        _
    $region6: #{tpu_custom_call.1} parent=1 // loop_footer
      %s23 = sadd.s32 1, %s19
    $region7: #{tpu_custom_call.1} parent=1 // loop_footer_branch
      %18 = sbr.rel target = $region3
    $region8: #{tpu_custom_call.1} parent=1 // loop_exit
      _
    %432 = vsyncpa [#allocation5], 1
    %s433 = scalar_lea.sflag [#allocation5], 1
    %434 = vsyncpa %s433, 1
    %435 = vsyncpa [#allocation8], 1
    %436 = vsyncpa [#allocation11], 1
    %s437 = scalar_lea.sflag [#allocation11], 1
    %438 = vsyncpa %s437, 1
    %439 = vsyncpa [#allocation6], 1
    %s440 = scalar_lea.sflag [#allocation6], 1
    %441 = vsyncpa %s440, 1

</llo_original>
